<compile_context>
chip_gen: v7x
topology: tpu7x:2x2x1
jax: 0.10.0
libtpu: 0.0.40
codegen_flags: <defaults>
</compile_context>

<pallas_src>
import jax
import jax.numpy as jnp
from jax import lax
from jax.experimental import pallas as pl
from jax.experimental.pallas import tpu as pltpu

EPS = 1e-5
NEG_SLOPE = 0.01        # PyTorch LeakyReLU default
LANE = 128


def _leaky_relu(x):
    return jnp.where(x > 0, x, NEG_SLOPE * x)


def _bn_leaky(h, gamma, beta):
    """Training-mode BatchNorm1d (biased var) folded into scale/shift, + LeakyReLU.

    Single pass over h for the batch stats; apply is one mul + one add/elem.
    """
    inv_b = 1.0 / h.shape[0]
    s = jnp.sum(h, axis=0, keepdims=True)
    ss = jnp.sum(h * h, axis=0, keepdims=True)
    mean = s * inv_b
    var = jnp.maximum(ss * inv_b - mean * mean, 0.0)   # clamp cancellation
    scale = gamma * lax.rsqrt(var + EPS)               # (1, Hp)
    shift = beta - mean * scale                        # (1, Hp)
    y = h * scale + shift
    return _leaky_relu(y)


def critic_kernel(x_ref, cx_ref, a_ref, w1_ref, w2_ref, w3_ref, w4_ref,
                  vec_ref, o_ref):
    # Packed (8, Hp) f32 tile of all small per-feature vector operands.
    vec = vec_ref[...]
    g1, be1 = vec[0:1, :], vec[1:2, :]
    g2, be2 = vec[2:3, :], vec[3:4, :]
    w5_row = vec[4:5, :]
    b5 = vec[5:6, 0:1]

    bf = jnp.bfloat16
    # fc1_1 + fc1_2 + fc1_3: three bf16 MXU matmuls, f32 accumulation.
    # (Biases dropped: they are cancelled exactly by the BN mean subtraction.)
    h = jnp.dot(x_ref[...].astype(bf), w1_ref[...],
                preferred_element_type=jnp.float32)
    h = h + jnp.dot(cx_ref[...].astype(bf), w2_ref[...],
                    preferred_element_type=jnp.float32)
    h = h + jnp.dot(a_ref[...].astype(bf), w3_ref[...],
                    preferred_element_type=jnp.float32)
    h = _bn_leaky(h, g1, be1)

    # fc2 (bias dropped for the same reason), bf16 MXU matmul, f32 accumulate.
    h = jnp.dot(h.astype(bf), w4_ref[...], preferred_element_type=jnp.float32)
    h = _bn_leaky(h, g2, be2)

    # fc3 (N=1): VPU multiply + cross-lane (XLU) reduce instead of a
    # degenerate MXU matmul.  Padded lanes of w5_row are zero -> exact.
    res = jnp.sum(h * w5_row, axis=-1, keepdims=True) + b5        # (B, 1)
    o_ref[...] = res.astype(o_ref.dtype)


def _padded_vmem_bytes(shape, dtype):
    """Bytes of a VMEM tile with (sublane, 128) padding; bf16 pads to 16 rows."""
    itemsize = jnp.dtype(dtype).itemsize
    sublane = max(8, 32 // itemsize)
    r, c = shape[-2], shape[-1]
    lead = 1
    for d in shape[:-2]:
        lead *= d
    rp = -(-r // sublane) * sublane
    cp = -(-c // LANE) * LANE
    return lead * rp * cp * itemsize


def _vmem_limit_bytes(B, Hp, operands):
    est = sum(_padded_vmem_bytes(a.shape, a.dtype) for a in operands)
    est += _padded_vmem_bytes((B, 1), jnp.float32)               # output
    est += 4 * _padded_vmem_bytes((B, Hp), jnp.float32)          # live f32 intermediates
    est += 2 * _padded_vmem_bytes((B, Hp), jnp.bfloat16)         # bf16 matmul inputs
    try:
        cap = int(pltpu.get_tpu_info().vmem_capacity_bytes)
    except Exception:  # pragma: no cover - conservative fallback
        cap = 128 << 20
    usable = int(cap * 0.8)                                      # leave headroom
    return int(max(16 << 20, min(usable, est + (4 << 20))))


def critic_forward(x, cx, action, kparams):
    B = x.shape[0]
    w1, w2, w3, w4, vec = (kparams[k] for k in ("w1", "w2", "w3", "w4", "vec"))
    Hp = w4.shape[1]

    operands = (x, cx, action, w1, w2, w3, w4, vec)
    vmem_limit = _vmem_limit_bytes(B, Hp, operands)

    vmem_spec = pl.BlockSpec(memory_space=pltpu.MemorySpace.VMEM)
    return pl.pallas_call(
        critic_kernel,
        out_shape=jax.ShapeDtypeStruct((B, 1), jnp.float32),
        in_specs=[vmem_spec] * len(operands),
        out_specs=vmem_spec,
        compiler_params=pltpu.CompilerParams(vmem_limit_bytes=vmem_limit),
    )(*operands)


def init_params(key, len_states, classes, num_actions, hidden):
    """PyTorch-layout parameters (weights stored as [in, out])."""
    ks = jax.random.split(key, 5)

    def lin(k, fan_in, fan_out):
        bound = 1.0 / jnp.sqrt(fan_in)
        kw, kb = jax.random.split(k)
        w = jax.random.uniform(kw, (fan_in, fan_out), jnp.float32, -bound, bound)
        b = jax.random.uniform(kb, (1, fan_out), jnp.float32, -bound, bound)
        return w, b

    w1, b1 = lin(ks[0], len_states, hidden)
    w2, b2 = lin(ks[1], classes, hidden)
    w3, b3 = lin(ks[2], num_actions, hidden)
    w4, b4 = lin(ks[3], hidden, hidden)
    w5, b5 = lin(ks[4], hidden, 1)
    return dict(
        w1=w1, b1=b1, w2=w2, b2=b2, w3=w3, b3=b3,
        g1=jnp.ones((1, hidden), jnp.float32), be1=jnp.zeros((1, hidden), jnp.float32),
        w4=w4, b4=b4,
        g2=jnp.ones((1, hidden), jnp.float32), be2=jnp.zeros((1, hidden), jnp.float32),
        w5=w5, b5=b5,
    )


def pack_params(p):
    """Pack PyTorch-layout params into the kernel operands (hidden padded to 128)."""
    hidden = p["w4"].shape[0]
    Hp = -(-hidden // LANE) * LANE
    ph = Hp - hidden

    def pad_w(w):                                   # (in, hidden) -> (in, Hp) bf16
        return jnp.pad(w, ((0, 0), (0, ph))).astype(jnp.bfloat16)

    w1 = pad_w(p["w1"])
    w2 = pad_w(p["w2"])
    w3 = pad_w(p["w3"])
    w4 = jnp.pad(p["w4"], ((0, ph), (0, ph))).astype(jnp.bfloat16)

    def pad_v(v):                                   # (hidden,) -> (Hp,)
        return jnp.pad(v, (0, ph))

    # Pre-BN biases b1/b2/b3/b4 intentionally omitted (cancelled by BN mean).
    vec = jnp.zeros((8, Hp), jnp.float32)
    vec = vec.at[0].set(pad_v(p["g1"][0]))                         # bn1 gamma
    vec = vec.at[1].set(pad_v(p["be1"][0]))                        # bn1 beta
    vec = vec.at[2].set(pad_v(p["g2"][0]))                         # bn2 gamma
    vec = vec.at[3].set(pad_v(p["be2"][0]))                        # bn2 beta
    vec = vec.at[4].set(pad_v(p["w5"][:, 0]))                      # fc3 weight col
    vec = vec.at[5].set(jnp.full((Hp,), p["b5"][0, 0], jnp.float32))  # fc3 bias
    return dict(w1=w1, w2=w2, w3=w3, w4=w4, vec=vec)


def _batchnorm_train_ref(x, gamma, beta):
    mean = jnp.mean(x, axis=0, keepdims=True)
    diff = x - mean
    var = jnp.mean(diff * diff, axis=0, keepdims=True)
    return diff * lax.rsqrt(var + EPS) * gamma + beta


def critic_ref(x, cx, a, p):
    """Pure-f32 reference matching the PyTorch module."""
    out = x @ p["w1"] + p["b1"] + cx @ p["w2"] + p["b2"] + a @ p["w3"] + p["b3"]
    out = _leaky_relu(_batchnorm_train_ref(out, p["g1"], p["be1"]))
    out = out @ p["w4"] + p["b4"]
    out = _leaky_relu(_batchnorm_train_ref(out, p["g2"], p["be2"]))
    return out @ p["w5"] + p["b5"]


def critic_ref_kernel_math(x, cx, a, p):
    """Reference emulating the kernel's math (bf16 matmuls, no pre-BN bias,
    single-pass scale/shift BatchNorm)."""
    bf = jnp.bfloat16
    h = jnp.dot(x.astype(bf), p["w1"].astype(bf), preferred_element_type=jnp.float32)
    h = h + jnp.dot(cx.astype(bf), p["w2"].astype(bf), preferred_element_type=jnp.float32)
    h = h + jnp.dot(a.astype(bf), p["w3"].astype(bf), preferred_element_type=jnp.float32)
    h = _bn_leaky(h, p["g1"], p["be1"])
    h = jnp.dot(h.astype(bf), p["w4"].astype(bf), preferred_element_type=jnp.float32)
    h = _bn_leaky(h, p["g2"], p["be2"])
    return jnp.sum(h * p["w5"][:, 0][None, :], axis=-1, keepdims=True) + p["b5"]


if __name__ == "__main__":
    # Small shapes implied by the forward: flat state / class / action vectors.
    B, LEN_STATES, CLASSES, NUM_ACTIONS, HIDDEN = 8, 16, 4, 6, 32

    key = jax.random.PRNGKey(0)
    kx, kcx, ka, kp = jax.random.split(key, 4)
    x = jax.random.normal(kx, (B, LEN_STATES), jnp.float32)
    cx = jax.random.normal(kcx, (B, CLASSES), jnp.float32)
    action = jax.random.normal(ka, (B, NUM_ACTIONS), jnp.float32)

    params = init_params(kp, LEN_STATES, CLASSES, NUM_ACTIONS, HIDDEN)
    kparams = pack_params(params)

    out = critic_forward(x, cx, action, kparams)
    out = jax.block_until_ready(out)
    assert out.shape == (B, 1)

    # Tight check vs. a JAX reference that emulates the kernel's precision/math.
    ref_k = critic_ref_kernel_math(x, cx, action, params)
    assert jnp.allclose(out, ref_k, atol=5e-3, rtol=5e-3), \
        "mismatch vs. kernel-math-emulating reference"

    # Loose sanity check vs. the pure-f32 PyTorch-semantics reference
    # (bf16 matmuls introduce ~1e-2-level deviation, as expected).
    ref_f32 = critic_ref(x, cx, action, params)
    assert jnp.allclose(out, ref_f32, atol=1e-1, rtol=1e-1), \
        "mismatch vs. f32 reference"

    print("KERNEL_OK")
</pallas_src>

<mosaic_0001>
module attributes {stable_mosaic.version = 11 : i64} {
  func.func @critic_kernel(%arg0: memref<8x16xf32, #tpu.memory_space<vmem>>, %arg1: memref<8x4xf32, #tpu.memory_space<vmem>>, %arg2: memref<8x6xf32, #tpu.memory_space<vmem>>, %arg3: memref<16x128xbf16, #tpu.memory_space<vmem>>, %arg4: memref<4x128xbf16, #tpu.memory_space<vmem>>, %arg5: memref<6x128xbf16, #tpu.memory_space<vmem>>, %arg6: memref<128x128xbf16, #tpu.memory_space<vmem>>, %arg7: memref<8x128xf32, #tpu.memory_space<vmem>>, %arg8: memref<8x1xf32, #tpu.memory_space<vmem>>) attributes {dimension_semantics = [], scalar_prefetch = 0 : i64, scratch_operands = 0 : i64, tpu.core_type = #tpu.core_type<tc>} {
    %c0 = arith.constant 0 : index
    %c0_0 = arith.constant 0 : index
    %0 = vector.load %arg7[%c0, %c0_0] : memref<8x128xf32, #tpu.memory_space<vmem>>, vector<8x128xf32>
    %1 = vector.extract_strided_slice %0 {offsets = [0, 0], sizes = [1, 128], strides = [1, 1]} : vector<8x128xf32> to vector<1x128xf32>
    %2 = vector.extract_strided_slice %0 {offsets = [1, 0], sizes = [1, 128], strides = [1, 1]} : vector<8x128xf32> to vector<1x128xf32>
    %3 = vector.extract_strided_slice %0 {offsets = [2, 0], sizes = [1, 128], strides = [1, 1]} : vector<8x128xf32> to vector<1x128xf32>
    %4 = vector.extract_strided_slice %0 {offsets = [3, 0], sizes = [1, 128], strides = [1, 1]} : vector<8x128xf32> to vector<1x128xf32>
    %5 = vector.extract_strided_slice %0 {offsets = [4, 0], sizes = [1, 128], strides = [1, 1]} : vector<8x128xf32> to vector<1x128xf32>
    %6 = vector.extract_strided_slice %0 {offsets = [5, 0], sizes = [1, 1], strides = [1, 1]} : vector<8x128xf32> to vector<1x1xf32>
    %c0_1 = arith.constant 0 : index
    %c0_2 = arith.constant 0 : index
    %7 = vector.load %arg0[%c0_1, %c0_2] : memref<8x16xf32, #tpu.memory_space<vmem>>, vector<8x16xf32>
    %8 = arith.truncf %7 : vector<8x16xf32> to vector<8x16xbf16>
    %c0_3 = arith.constant 0 : index
    %c0_4 = arith.constant 0 : index
    %9 = vector.load %arg3[%c0_3, %c0_4] : memref<16x128xbf16, #tpu.memory_space<vmem>>, vector<16x128xbf16>
    %cst = arith.constant dense<0.000000e+00> : vector<8x128xf32>
    %10 = tpu.matmul %8, %9, %cst {dimension_numbers = #tpu.dot_dimension_numbers<[1], [0], [0], [1], [0, 0, 1, 1], [], []>} : vector<8x16xbf16>, vector<16x128xbf16>, vector<8x128xf32> -> vector<8x128xf32>
    %c0_5 = arith.constant 0 : index
    %c0_6 = arith.constant 0 : index
    %11 = vector.load %arg1[%c0_5, %c0_6] : memref<8x4xf32, #tpu.memory_space<vmem>>, vector<8x4xf32>
    %12 = arith.truncf %11 : vector<8x4xf32> to vector<8x4xbf16>
    %c0_7 = arith.constant 0 : index
    %c0_8 = arith.constant 0 : index
    %13 = vector.load %arg4[%c0_7, %c0_8] : memref<4x128xbf16, #tpu.memory_space<vmem>>, vector<4x128xbf16>
    %cst_9 = arith.constant dense<0.000000e+00> : vector<8x128xf32>
    %14 = tpu.matmul %12, %13, %cst_9 {dimension_numbers = #tpu.dot_dimension_numbers<[1], [0], [0], [1], [0, 0, 1, 1], [], []>} : vector<8x4xbf16>, vector<4x128xbf16>, vector<8x128xf32> -> vector<8x128xf32>
    %15 = arith.addf %10, %14 : vector<8x128xf32>
    %c0_10 = arith.constant 0 : index
    %c0_11 = arith.constant 0 : index
    %16 = vector.load %arg2[%c0_10, %c0_11] : memref<8x6xf32, #tpu.memory_space<vmem>>, vector<8x6xf32>
    %17 = arith.truncf %16 : vector<8x6xf32> to vector<8x6xbf16>
    %c0_12 = arith.constant 0 : index
    %c0_13 = arith.constant 0 : index
    %18 = vector.load %arg5[%c0_12, %c0_13] : memref<6x128xbf16, #tpu.memory_space<vmem>>, vector<6x128xbf16>
    %cst_14 = arith.constant dense<0.000000e+00> : vector<8x128xf32>
    %19 = tpu.matmul %17, %18, %cst_14 {dimension_numbers = #tpu.dot_dimension_numbers<[1], [0], [0], [1], [0, 0, 1, 1], [], []>} : vector<8x6xbf16>, vector<6x128xbf16>, vector<8x128xf32> -> vector<8x128xf32>
    %20 = arith.addf %15, %19 : vector<8x128xf32>
    %cst_15 = arith.constant dense<0.000000e+00> : vector<128xf32>
    %21 = vector.multi_reduction <add>, %20, %cst_15 [0] : vector<8x128xf32> to vector<128xf32>
    %22 = vector.shape_cast %21 : vector<128xf32> to vector<1x128xf32>
    %23 = arith.mulf %20, %20 : vector<8x128xf32>
    %cst_16 = arith.constant dense<0.000000e+00> : vector<128xf32>
    %24 = vector.multi_reduction <add>, %23, %cst_16 [0] : vector<8x128xf32> to vector<128xf32>
    %25 = vector.shape_cast %24 : vector<128xf32> to vector<1x128xf32>
    %cst_17 = arith.constant 1.250000e-01 : f32
    %26 = vector.broadcast %cst_17 : f32 to vector<1x128xf32>
    %27 = arith.mulf %22, %26 : vector<1x128xf32>
    %cst_18 = arith.constant 1.250000e-01 : f32
    %28 = vector.broadcast %cst_18 : f32 to vector<1x128xf32>
    %29 = arith.mulf %25, %28 : vector<1x128xf32>
    %30 = arith.mulf %27, %27 : vector<1x128xf32>
    %31 = arith.subf %29, %30 : vector<1x128xf32>
    %cst_19 = arith.constant 0.000000e+00 : f32
    %32 = vector.broadcast %cst_19 : f32 to vector<1x128xf32>
    %33 = arith.maximumf %31, %32 : vector<1x128xf32>
    %cst_20 = arith.constant 9.99999974E-6 : f32
    %34 = vector.broadcast %cst_20 : f32 to vector<1x128xf32>
    %35 = arith.addf %33, %34 : vector<1x128xf32>
    %36 = math.rsqrt %35 : vector<1x128xf32>
    %37 = arith.mulf %1, %36 : vector<1x128xf32>
    %38 = arith.mulf %27, %37 : vector<1x128xf32>
    %39 = arith.subf %2, %38 : vector<1x128xf32>
    %40 = vector.broadcast %37 : vector<1x128xf32> to vector<8x128xf32>
    %41 = arith.mulf %20, %40 : vector<8x128xf32>
    %42 = vector.broadcast %39 : vector<1x128xf32> to vector<8x128xf32>
    %43 = arith.addf %41, %42 : vector<8x128xf32>
    %cst_21 = arith.constant 0.000000e+00 : f32
    %44 = vector.broadcast %cst_21 : f32 to vector<8x128xf32>
    %45 = arith.cmpf ogt, %43, %44 : vector<8x128xf32>
    %cst_22 = arith.constant 0.00999999977 : f32
    %46 = vector.broadcast %cst_22 : f32 to vector<8x128xf32>
    %47 = arith.mulf %46, %43 : vector<8x128xf32>
    %48 = arith.select %45, %43, %47 : vector<8x128xi1>, vector<8x128xf32>
    %49 = arith.truncf %48 : vector<8x128xf32> to vector<8x128xbf16>
    %c0_23 = arith.constant 0 : index
    %c0_24 = arith.constant 0 : index
    %50 = vector.load %arg6[%c0_23, %c0_24] : memref<128x128xbf16, #tpu.memory_space<vmem>>, vector<128x128xbf16>
    %cst_25 = arith.constant dense<0.000000e+00> : vector<8x128xf32>
    %51 = tpu.matmul %49, %50, %cst_25 {dimension_numbers = #tpu.dot_dimension_numbers<[1], [0], [0], [1], [0, 0, 1, 1], [], []>} : vector<8x128xbf16>, vector<128x128xbf16>, vector<8x128xf32> -> vector<8x128xf32>
    %cst_26 = arith.constant dense<0.000000e+00> : vector<128xf32>
    %52 = vector.multi_reduction <add>, %51, %cst_26 [0] : vector<8x128xf32> to vector<128xf32>
    %53 = vector.shape_cast %52 : vector<128xf32> to vector<1x128xf32>
    %54 = arith.mulf %51, %51 : vector<8x128xf32>
    %cst_27 = arith.constant dense<0.000000e+00> : vector<128xf32>
    %55 = vector.multi_reduction <add>, %54, %cst_27 [0] : vector<8x128xf32> to vector<128xf32>
    %56 = vector.shape_cast %55 : vector<128xf32> to vector<1x128xf32>
    %cst_28 = arith.constant 1.250000e-01 : f32
    %57 = vector.broadcast %cst_28 : f32 to vector<1x128xf32>
    %58 = arith.mulf %53, %57 : vector<1x128xf32>
    %cst_29 = arith.constant 1.250000e-01 : f32
    %59 = vector.broadcast %cst_29 : f32 to vector<1x128xf32>
    %60 = arith.mulf %56, %59 : vector<1x128xf32>
    %61 = arith.mulf %58, %58 : vector<1x128xf32>
    %62 = arith.subf %60, %61 : vector<1x128xf32>
    %cst_30 = arith.constant 0.000000e+00 : f32
    %63 = vector.broadcast %cst_30 : f32 to vector<1x128xf32>
    %64 = arith.maximumf %62, %63 : vector<1x128xf32>
    %cst_31 = arith.constant 9.99999974E-6 : f32
    %65 = vector.broadcast %cst_31 : f32 to vector<1x128xf32>
    %66 = arith.addf %64, %65 : vector<1x128xf32>
    %67 = math.rsqrt %66 : vector<1x128xf32>
    %68 = arith.mulf %3, %67 : vector<1x128xf32>
    %69 = arith.mulf %58, %68 : vector<1x128xf32>
    %70 = arith.subf %4, %69 : vector<1x128xf32>
    %71 = vector.broadcast %68 : vector<1x128xf32> to vector<8x128xf32>
    %72 = arith.mulf %51, %71 : vector<8x128xf32>
    %73 = vector.broadcast %70 : vector<1x128xf32> to vector<8x128xf32>
    %74 = arith.addf %72, %73 : vector<8x128xf32>
    %cst_32 = arith.constant 0.000000e+00 : f32
    %75 = vector.broadcast %cst_32 : f32 to vector<8x128xf32>
    %76 = arith.cmpf ogt, %74, %75 : vector<8x128xf32>
    %cst_33 = arith.constant 0.00999999977 : f32
    %77 = vector.broadcast %cst_33 : f32 to vector<8x128xf32>
    %78 = arith.mulf %77, %74 : vector<8x128xf32>
    %79 = arith.select %76, %74, %78 : vector<8x128xi1>, vector<8x128xf32>
    %80 = vector.broadcast %5 : vector<1x128xf32> to vector<8x128xf32>
    %81 = arith.mulf %79, %80 : vector<8x128xf32>
    %cst_34 = arith.constant dense<0.000000e+00> : vector<8xf32>
    %82 = vector.multi_reduction <add>, %81, %cst_34 [1] : vector<8x128xf32> to vector<8xf32>
    %83 = vector.shape_cast %82 : vector<8xf32> to vector<8x1xf32>
    %84 = vector.broadcast %6 : vector<1x1xf32> to vector<8x1xf32>
    %85 = arith.addf %83, %84 : vector<8x1xf32>
    %c0_35 = arith.constant 0 : index
    %c0_36 = arith.constant 0 : index
    %86 = vector.load %arg8[%c0_35, %c0_36] : memref<8x1xf32, #tpu.memory_space<vmem>>, vector<8x1xf32>
    tpu.vector_store %arg8[%c0_35, %c0_36], %85 {strides = array<i32>} : memref<8x1xf32, #tpu.memory_space<vmem>>, vector<8x1xf32>,
    return
  }
}

</mosaic_0001>

<llo_original>
// kernel: tpu_custom_call.1
$region0: #{tpu_custom_call.1}
  #allocation0 [shape = 'u32[]', space=smem, size = 0x4, offset = 0x4, fixed_abs, tag = 'smem constant byte address 0x4 - core index']
  #allocation1 [shape = 'u32[144,128]{1,0:T(1,128)}', space=vmem, size = 0x12000, scoped, tag = 'internal scratch']
  %s0 = inlined_call_operand.vmem [shape: f32[8,16], index: 0, kind: input, shape index: {}]
  %s1 = inlined_call_operand.vmem [shape: f32[8,4], index: 1, kind: input, shape index: {}]
  %s2 = inlined_call_operand.vmem [shape: f32[8,6], index: 2, kind: input, shape index: {}]
  %s3 = inlined_call_operand.hbm [shape: bf16[16,128], index: 3, kind: input, shape index: {}]
  %s4 = inlined_call_operand.vmem [shape: bf16[4,128], index: 4, kind: input, shape index: {}]
  %s5 = inlined_call_operand.vmem [shape: bf16[6,128], index: 5, kind: input, shape index: {}]
  %s6 = inlined_call_operand.hbm [shape: bf16[128,128], index: 6, kind: input, shape index: {}]
  %s7 = inlined_call_operand.vmem [shape: f32[8,128], index: 7, kind: input, shape index: {}]
  %s8 = inlined_call_operand.vmem [shape: f32[8,1], index: 8, kind: output, shape index: {}]
  %s9 = sld [smem:[#allocation0]]
  $region50: #{tpu_custom_call.1} parent=0
    _
  %s11 = ssub.s32 1, %s9
  %s12 = scalar_select 0, %s11, %s9
  $region1: #{tpu_custom_call.1} parent=0
    #allocation2 [shape = 'u8[4096]{0}', space=vmem, size = 0x1000, scoped, tag = 'input window, operand 3, single buffered']
    #allocation3 [shape = 's32[1]{0}', space=sflag, size = 0x4, scoped, tag = 'scoped memory for tpu_custom_call.1']
    #allocation4 [shape = 'u8[32768]{0}', space=vmem, size = 0x8000, scoped, tag = 'input window, operand 6, single buffered']
    #allocation5 [shape = 's32[1]{0}', space=sflag, size = 0x4, scoped, tag = 'scoped memory for tpu_custom_call.1']
    %13 = vsyncpa [#allocation3], 0
    %14 = vsyncpa [#allocation5], 0
    // Predicated region
    $region2: #{tpu_custom_call.1} parent=1 // pred_check
      _
    $region3: #{tpu_custom_call.1} parent=1 // pred_check_branch
      %16 = sbr.rel (0) target = $region5
    $region4: #{tpu_custom_call.1} parent=1 // pred_region
      _
    $region5: #{tpu_custom_call.1} parent=1 // pred_fallthru
      _
    // Predicated region
    $region6: #{tpu_custom_call.1} parent=1 // pred_check
      _
    $region7: #{tpu_custom_call.1} parent=1 // pred_check_branch
      %18 = sbr.rel (0) target = $region9
    $region8: #{tpu_custom_call.1} parent=1 // pred_region
      _
    $region9: #{tpu_custom_call.1} parent=1 // pred_fallthru
      _
    // Predicated region
    $region10: #{tpu_custom_call.1} parent=1 // pred_check
      _
    $region11: #{tpu_custom_call.1} parent=1 // pred_check_branch
      %20 = sbr.rel (0) target = $region13
    $region12: #{tpu_custom_call.1} parent=1 // pred_region
      _
    $region13: #{tpu_custom_call.1} parent=1 // pred_fallthru
      _
    // Predicated region
    $region14: #{tpu_custom_call.1} parent=1 // pred_check
      _
    $region15: #{tpu_custom_call.1} parent=1 // pred_check_branch
      %22 = sbr.rel (0) target = $region17
    $region16: #{tpu_custom_call.1} parent=1 // pred_region
      %s24 = ssub.s32 128, 128
      %25 = vsyncadd [#allocation3], %s24
      %s26 = sshll.u32 [#allocation2], 4
      %s27 = int_to_ptr.vmem [resolvable:$true] %s26
      %32 = dma.hbm_to_vmem [thread:$0]  %s3, 128, %s27, [#allocation3], 64, 64, 4
    $region17: #{tpu_custom_call.1} parent=1 // pred_fallthru
      _
    // Predicated region
    $region18: #{tpu_custom_call.1} parent=1 // pred_check
      _
    $region19: #{tpu_custom_call.1} parent=1 // pred_check_branch
      %34 = sbr.rel (0) target = $region21
    $region20: #{tpu_custom_call.1} parent=1 // pred_region
      _
    $region21: #{tpu_custom_call.1} parent=1 // pred_fallthru
      _
    // Predicated region
    $region22: #{tpu_custom_call.1} parent=1 // pred_check
      _
    $region23: #{tpu_custom_call.1} parent=1 // pred_check_branch
      %36 = sbr.rel (0) target = $region25
    $region24: #{tpu_custom_call.1} parent=1 // pred_region
      _
    $region25: #{tpu_custom_call.1} parent=1 // pred_fallthru
      _
    // Predicated region
    $region26: #{tpu_custom_call.1} parent=1 // pred_check
      _
    $region27: #{tpu_custom_call.1} parent=1 // pred_check_branch
      %38 = sbr.rel (0) target = $region29
    $region28: #{tpu_custom_call.1} parent=1 // pred_region
      %s40 = ssub.s32 1024, 1024
      %41 = vsyncadd [#allocation5], %s40
      %s42 = sshll.u32 [#allocation4], 4
      %s43 = int_to_ptr.vmem [resolvable:$true] %s42
      %48 = dma.hbm_to_vmem [thread:$0]  %s6, 1024, %s43, [#allocation5], 64, 64, 4
    $region29: #{tpu_custom_call.1} parent=1 // pred_fallthru
      _
    // Predicated region
    $region30: #{tpu_custom_call.1} parent=1 // pred_check
      _
    $region31: #{tpu_custom_call.1} parent=1 // pred_check_branch
      %50 = sbr.rel (0) target = $region33
    $region32: #{tpu_custom_call.1} parent=1 // pred_region
      _
    $region33: #{tpu_custom_call.1} parent=1 // pred_fallthru
      _
    // Predicated region
    $region34: #{tpu_custom_call.1} parent=1 // pred_check
      _
    $region35: #{tpu_custom_call.1} parent=1 // pred_check_branch
      %52 = sbr.rel (0) target = $region37
    $region36: #{tpu_custom_call.1} parent=1 // pred_region
      %53 = dma.done [#allocation3], 128
    $region37: #{tpu_custom_call.1} parent=1 // pred_fallthru
      _
    // Predicated region
    $region38: #{tpu_custom_call.1} parent=1 // pred_check
      _
    $region39: #{tpu_custom_call.1} parent=1 // pred_check_branch
      %55 = sbr.rel (0) target = $region41
    $region40: #{tpu_custom_call.1} parent=1 // pred_region
      %56 = dma.done [#allocation5], 1024
    $region41: #{tpu_custom_call.1} parent=1 // pred_fallthru
      _
    %v58 = vld [vmem:[%s7] sm:$0xff]
    %v59 = vld [vmem:[%s0] sm:$0xff]
    %v60 = vpack.c.bf16 %v59, %v59
    %v61 = vld [vmem:[#allocation2] sm:$0xf]
    %v62 = vld [vmem:[#allocation2 + $0x4] sm:$0xf]
    %v63 = vld [vmem:[%s1] sm:$0xff]
    %v64 = vpack.c.bf16 %v63, %v63
    %v65 = vld [vmem:[%s4] sm:$0x3]
    %vm66 = vcmask 31744
    %v68 = vsel %vm66, %v64, 0
    %vm70 = vcmask 1041408
    %v72 = vsel %vm70, %v65, 0
    %74 = vmatprep.subr.bf16.mxu0 0
    %75 = vmatpush1.bf16.msra.mxu0 %v72
    %76 = vmatprep.subr.bf16.mxu0 0
    %77 = vmatpush1.bf16.msra.mxu0 0
    %78 = vmatprep.subr.bf16.mxu0 0
    %79 = vmatpush1.bf16.msra.mxu0 0
    %80 = vmatprep.subr.bf16.mxu0 0
    %81 = vmatpush1.bf16.msra.mxu0 0
    %82 = vmatprep.subr.bf16.mxu0 0
    %83 = vmatpush1.bf16.msra.mxu0 0
    %84 = vmatprep.subr.bf16.mxu0 0
    %85 = vmatpush1.bf16.msra.mxu0 0
    %86 = vmatprep.subr.bf16.mxu0 0
    %87 = vmatpush1.bf16.msra.mxu0 0
    %88 = vmatprep.subr.bf16.mxu0 0
    %89 = vmatpush1.bf16.msra.mxu0 0
    %90 = vmatprep.subr.bf16.mxu0 0
    %91 = vmatpush1.bf16.msra.mxu0 0
    %92 = vmatprep.subr.bf16.mxu0 0
    %93 = vmatpush1.bf16.msra.mxu0 0
    %94 = vmatprep.subr.bf16.mxu0 0
    %95 = vmatpush1.bf16.msra.mxu0 0
    %96 = vmatprep.subr.bf16.mxu0 0
    %97 = vmatpush1.bf16.msra.mxu0 0
    %98 = vmatprep.subr.bf16.mxu0 0
    %99 = vmatpush1.bf16.msra.mxu0 0
    %100 = vmatprep.subr.bf16.mxu0 0
    %101 = vmatpush1.bf16.msra.mxu0 0
    %102 = vmatprep.subr.bf16.mxu0 0
    %103 = vmatpush1.bf16.msra.mxu0 0
    %104 = vmatprep.subr.bf16.mxu0 0
    %105 = vmatpush1.bf16.msra.mxu0 0
    %106 = vmatprep.mubr.bf16.mxu0 0
    %107 = vmatmul.mubr.bf16.gmra.mrb[0].mxu0 %v68
    %v108 = vpop.f32.mrb[0].mxu0
    %v109 = vadd.f32 0.0, %v108
    %v110 = vpop.f32.mrb[0].mxu0
    %v111 = vpop.f32.mrb[0].mxu0
    %v112 = vpop.f32.mrb[0].mxu0
    %113 = vdwg.mxu0
    %v116 = vunpack.c.l.b16 %v61
    %v117 = vunpack.c.l.b16 %v62
    %v118 = vpack.c.b16 %v117, %v116
    %vm120 = vcmask 130048
    %v122 = vsel %vm120, %v60, 0
    %124 = vmatprep.subr.bf16.mxu0 0
    %125 = vmatpush1.bf16.msra.mxu0 %v118
    %126 = vmatprep.subr.bf16.mxu0 0
    %127 = vmatpush1.bf16.msra.mxu0 0
    %128 = vmatprep.subr.bf16.mxu0 0
    %129 = vmatpush1.bf16.msra.mxu0 0
    %130 = vmatprep.subr.bf16.mxu0 0
    %131 = vmatpush1.bf16.msra.mxu0 0
    %132 = vmatprep.subr.bf16.mxu0 0
    %133 = vmatpush1.bf16.msra.mxu0 0
    %134 = vmatprep.subr.bf16.mxu0 0
    %135 = vmatpush1.bf16.msra.mxu0 0
    %136 = vmatprep.subr.bf16.mxu0 0
    %137 = vmatpush1.bf16.msra.mxu0 0
    %138 = vmatprep.subr.bf16.mxu0 0
    %139 = vmatpush1.bf16.msra.mxu0 0
    %140 = vmatprep.subr.bf16.mxu0 0
    %141 = vmatpush1.bf16.msra.mxu0 0
    %142 = vmatprep.subr.bf16.mxu0 0
    %143 = vmatpush1.bf16.msra.mxu0 0
    %144 = vmatprep.subr.bf16.mxu0 0
    %145 = vmatpush1.bf16.msra.mxu0 0
    %146 = vmatprep.subr.bf16.mxu0 0
    %147 = vmatpush1.bf16.msra.mxu0 0
    %148 = vmatprep.subr.bf16.mxu0 0
    %149 = vmatpush1.bf16.msra.mxu0 0
    %150 = vmatprep.subr.bf16.mxu0 0
    %151 = vmatpush1.bf16.msra.mxu0 0
    %152 = vmatprep.subr.bf16.mxu0 0
    %153 = vmatpush1.bf16.msra.mxu0 0
    %154 = vmatprep.subr.bf16.mxu0 0
    %155 = vmatpush1.bf16.msra.mxu0 0
    %156 = vmatprep.mubr.bf16.mxu0 0
    %157 = vmatmul.mubr.bf16.gmra.mrb[0].mxu0 %v122
    %v158 = vpop.f32.mrb[0].mxu0
    %v159 = vadd.f32 %v109, %v158
    %v160 = vpop.f32.mrb[0].mxu0
    %v161 = vpop.f32.mrb[0].mxu0
    %v162 = vpop.f32.mrb[0].mxu0
    %163 = vdwg.mxu0
    %v164 = vld [vmem:[%s2] sm:$0xff]
    %v165 = vpack.c.bf16 %v164, %v164
    %v166 = vld [vmem:[%s5] sm:$0x7]
    %vm167 = vcmask 48128
    %v169 = vsel %vm167, %v165, 0
    %vm171 = vcmask 1042432
    %v173 = vsel %vm171, %v166, 0
    %175 = vmatprep.subr.bf16.mxu0 0
    %176 = vmatpush1.bf16.msra.mxu0 %v173
    %177 = vmatprep.subr.bf16.mxu0 0
    %178 = vmatpush1.bf16.msra.mxu0 0
    %179 = vmatprep.subr.bf16.mxu0 0
    %180 = vmatpush1.bf16.msra.mxu0 0
    %181 = vmatprep.subr.bf16.mxu0 0
    %182 = vmatpush1.bf16.msra.mxu0 0
    %183 = vmatprep.subr.bf16.mxu0 0
    %184 = vmatpush1.bf16.msra.mxu0 0
    %185 = vmatprep.subr.bf16.mxu0 0
    %186 = vmatpush1.bf16.msra.mxu0 0
    %187 = vmatprep.subr.bf16.mxu0 0
    %188 = vmatpush1.bf16.msra.mxu0 0
    %189 = vmatprep.subr.bf16.mxu0 0
    %190 = vmatpush1.bf16.msra.mxu0 0
    %191 = vmatprep.subr.bf16.mxu0 0
    %192 = vmatpush1.bf16.msra.mxu0 0
    %193 = vmatprep.subr.bf16.mxu0 0
    %194 = vmatpush1.bf16.msra.mxu0 0
    %195 = vmatprep.subr.bf16.mxu0 0
    %196 = vmatpush1.bf16.msra.mxu0 0
    %197 = vmatprep.subr.bf16.mxu0 0
    %198 = vmatpush1.bf16.msra.mxu0 0
    %199 = vmatprep.subr.bf16.mxu0 0
    %200 = vmatpush1.bf16.msra.mxu0 0
    %201 = vmatprep.subr.bf16.mxu0 0
    %202 = vmatpush1.bf16.msra.mxu0 0
    %203 = vmatprep.subr.bf16.mxu0 0
    %204 = vmatpush1.bf16.msra.mxu0 0
    %205 = vmatprep.subr.bf16.mxu0 0
    %206 = vmatpush1.bf16.msra.mxu0 0
    %207 = vmatprep.mubr.bf16.mxu0 0
    %208 = vmatmul.mubr.bf16.gmra.mrb[0].mxu0 %v169
    %v209 = vpop.f32.mrb[0].mxu0
    %v210 = vadd.f32 0.0, %v209
    %v211 = vpop.f32.mrb[0].mxu0
    %v212 = vpop.f32.mrb[0].mxu0
    %v213 = vpop.f32.mrb[0].mxu0
    %214 = vdwg.mxu0
    %v215 = vadd.f32 %v159, %v210
    %v216 = vrot.slane %v215, 4
    %v217 = vadd.f32 %v215, %v216
    %v218 = vrot.slane %v217, 2
    %v219 = vadd.f32 %v217, %v218
    %v220 = vrot.slane %v219, 1
    %v221 = vadd.f32 %v219, %v220
    %v222 = vmul.f32 %v215, %v215
    %v223 = vrot.slane %v222, 4
    %v224 = vadd.f32 %v222, %v223
    %v225 = vrot.slane %v224, 2
    %v226 = vadd.f32 %v224, %v225
    %v227 = vrot.slane %v226, 1
    %v228 = vadd.f32 %v226, %v227
    %v229 = vmul.f32 %v221, 0.125
    %v230 = vmul.f32 %v228, 0.125
    %v231 = vmul.f32 %v229, %v229
    %v232 = vsub.f32 %v230, %v231
    %v233 = vmax.f32 %v232, 0.0
    %v234 = vadd.f32 %v233, 1e-05
    %v235 = vrsqrt.pop %v234
    %v236 = vmul.f32 %v58, %v235
    %v237 = vmul.f32 %v229, %v236
    %v239 = vrot.slane %v237, 7
    %v241 = vsub.f32 %v58, %v239
    %v242 = vlaneseq
    %v243 = vshrl.u32 %v242, 7
    %v244 = vsub.s32 0, %v243
    %v245 = vrot.slane %v236, %v244
    %v246 = vmul.f32 %v215, %v245
    %v247 = vlaneseq
    %v248 = vshrl.u32 %v247, 7
    %v249 = vsub.s32 1, %v248
    %v250 = vrot.slane %v241, %v249
    %v251 = vadd.f32 %v246, %v250
    %vm252 = vcmp.gt.f32.partialorder %v251, 0.0
    %v253 = vmul.f32 %v251, 0.01
    %v254 = vsel %vm252, %v251, %v253
    %v255 = vpack.c.bf16 %v254, %v254
    %v256 = vld [vmem:[#allocation4] sm:$0xf]
    %v257 = vld [vmem:[#allocation4 + $0x4] sm:$0xf]
    %v258 = vld [vmem:[#allocation4 + $0x8] sm:$0xf]
    %v259 = vld [vmem:[#allocation4 + $0xc] sm:$0xf]
    %v260 = vld [vmem:[#allocation4 + $0x10] sm:$0xf]
    %v261 = vld [vmem:[#allocation4 + $0x14] sm:$0xf]
    %v262 = vld [vmem:[#allocation4 + $0x18] sm:$0xf]
    %v263 = vld [vmem:[#allocation4 + $0x1c] sm:$0xf]
    %v264 = vld [vmem:[#allocation4 + $0x20] sm:$0xf]
    %v265 = vld [vmem:[#allocation4 + $0x24] sm:$0xf]
    %v266 = vld [vmem:[#allocation4 + $0x28] sm:$0xf]
    %v267 = vld [vmem:[#allocation4 + $0x2c] sm:$0xf]
    %v268 = vld [vmem:[#allocation4 + $0x30] sm:$0xf]
    %v269 = vld [vmem:[#allocation4 + $0x34] sm:$0xf]
    %v270 = vld [vmem:[#allocation4 + $0x38] sm:$0xf]
    %v271 = vld [vmem:[#allocation4 + $0x3c] sm:$0xf]
    %v288 = vunpack.c.l.b16 %v256
    %v289 = vunpack.c.l.b16 %v257
    %v290 = vunpack.c.l.b16 %v258
    %v291 = vunpack.c.l.b16 %v259
    %v292 = vunpack.c.l.b16 %v260
    %v293 = vunpack.c.l.b16 %v261
    %v294 = vunpack.c.l.b16 %v262
    %v295 = vunpack.c.l.b16 %v263
    %v296 = vunpack.c.l.b16 %v264
    %v297 = vunpack.c.l.b16 %v265
    %v298 = vunpack.c.l.b16 %v266
    %v299 = vunpack.c.l.b16 %v267
    %v300 = vunpack.c.l.b16 %v268
    %v301 = vunpack.c.l.b16 %v269
    %v302 = vunpack.c.l.b16 %v270
    %v303 = vunpack.c.l.b16 %v271
    %v304 = vpack.c.b16 %v289, %v288
    %v305 = vpack.c.b16 %v291, %v290
    %v306 = vpack.c.b16 %v293, %v292
    %v307 = vpack.c.b16 %v295, %v294
    %v308 = vpack.c.b16 %v297, %v296
    %v309 = vpack.c.b16 %v299, %v298
    %v310 = vpack.c.b16 %v301, %v300
    %v311 = vpack.c.b16 %v303, %v302
    %320 = vmatprep.subr.bf16.mxu0 0
    %321 = vmatpush1.bf16.msra.mxu0 %v304
    %322 = vmatprep.subr.bf16.mxu0 0
    %323 = vmatpush1.bf16.msra.mxu0 %v305
    %324 = vmatprep.subr.bf16.mxu0 0
    %325 = vmatpush1.bf16.msra.mxu0 %v306
    %326 = vmatprep.subr.bf16.mxu0 0
    %327 = vmatpush1.bf16.msra.mxu0 %v307
    %328 = vmatprep.subr.bf16.mxu0 0
    %329 = vmatpush1.bf16.msra.mxu0 %v308
    %330 = vmatprep.subr.bf16.mxu0 0
    %331 = vmatpush1.bf16.msra.mxu0 %v309
    %332 = vmatprep.subr.bf16.mxu0 0
    %333 = vmatpush1.bf16.msra.mxu0 %v310
    %334 = vmatprep.subr.bf16.mxu0 0
    %335 = vmatpush1.bf16.msra.mxu0 %v311
    %336 = vmatprep.subr.bf16.mxu0 0
    %337 = vmatpush1.bf16.msra.mxu0 0
    %338 = vmatprep.subr.bf16.mxu0 0
    %339 = vmatpush1.bf16.msra.mxu0 0
    %340 = vmatprep.subr.bf16.mxu0 0
    %341 = vmatpush1.bf16.msra.mxu0 0
    %342 = vmatprep.subr.bf16.mxu0 0
    %343 = vmatpush1.bf16.msra.mxu0 0
    %344 = vmatprep.subr.bf16.mxu0 0
    %345 = vmatpush1.bf16.msra.mxu0 0
    %346 = vmatprep.subr.bf16.mxu0 0
    %347 = vmatpush1.bf16.msra.mxu0 0
    %348 = vmatprep.subr.bf16.mxu0 0
    %349 = vmatpush1.bf16.msra.mxu0 0
    %350 = vmatprep.subr.bf16.mxu0 0
    %351 = vmatpush1.bf16.msra.mxu0 0
    %352 = vmatprep.mubr.bf16.mxu0 0
    %353 = vmatmul.mubr.bf16.gmra.mrb[0].mxu0 %v255
    %v354 = vpop.f32.mrb[0].mxu0
    %v355 = vadd.f32 0.0, %v354
    %v356 = vpop.f32.mrb[0].mxu0
    %v357 = vpop.f32.mrb[0].mxu0
    %v358 = vpop.f32.mrb[0].mxu0
    %359 = vdwg.mxu0
    %v360 = vrot.slane %v355, 4
    %v361 = vadd.f32 %v355, %v360
    %v362 = vrot.slane %v361, 2
    %v363 = vadd.f32 %v361, %v362
    %v364 = vrot.slane %v363, 1
    %v365 = vadd.f32 %v363, %v364
    %v366 = vmul.f32 %v355, %v355
    %v367 = vrot.slane %v366, 4
    %v368 = vadd.f32 %v366, %v367
    %v369 = vrot.slane %v368, 2
    %v370 = vadd.f32 %v368, %v369
    %v371 = vrot.slane %v370, 1
    %v372 = vadd.f32 %v370, %v371
    %v373 = vmul.f32 %v365, 0.125
    %v374 = vmul.f32 %v372, 0.125
    %v375 = vmul.f32 %v373, %v373
    %v376 = vsub.f32 %v374, %v375
    %v377 = vmax.f32 %v376, 0.0
    %v378 = vadd.f32 %v377, 1e-05
    %v379 = vrsqrt.pop %v378
    %v380 = vmul.f32 %v58, %v379
    %v381 = vmul.f32 %v373, %v380
    %v383 = vrot.slane %v381, 7
    %v385 = vsub.f32 %v58, %v383
    %v386 = vlaneseq
    %v387 = vshrl.u32 %v386, 7
    %v388 = vsub.s32 2, %v387
    %v389 = vrot.slane %v380, %v388
    %v390 = vmul.f32 %v355, %v389
    %v391 = vlaneseq
    %v392 = vshrl.u32 %v391, 7
    %v393 = vsub.s32 3, %v392
    %v394 = vrot.slane %v385, %v393
    %v395 = vadd.f32 %v390, %v394
    %vm396 = vcmp.gt.f32.partialorder %v395, 0.0
    %v397 = vmul.f32 %v395, 0.01
    %v398 = vsel %vm396, %v395, %v397
    %v399 = vlaneseq
    %v400 = vshrl.u32 %v399, 7
    %v401 = vsub.s32 4, %v400
    %v402 = vrot.slane %v58, %v401
    %v403 = vmul.f32 %v398, %v402
    %404 = vadd.xlane.f32.xlu0 %v403
    %v405 = vpop.xlane.xlu0 %404
    %v406 = vlaneseq
    %v407 = vshrl.u32 %v406, 7
    %v408 = vsub.s32 5, %v407
    %v409 = vrot.slane %v58, %v408
    %v410 = vadd.f32 %v405, %v409
    %vm411 = vcmask 7168
    %412 = vst.msk [vmem:[%s8] sm:$0xff] %vm411, %v410
    // Predicated region
    $region42: #{tpu_custom_call.1} parent=1 // pred_check
      _
    $region43: #{tpu_custom_call.1} parent=1 // pred_check_branch
      %414 = sbr.rel (0) target = $region45
    $region44: #{tpu_custom_call.1} parent=1 // pred_region
      _
    $region45: #{tpu_custom_call.1} parent=1 // pred_fallthru
      _
    // Predicated region
    $region46: #{tpu_custom_call.1} parent=1 // pred_check
      _
    $region47: #{tpu_custom_call.1} parent=1 // pred_check_branch
      %416 = sbr.rel (0) target = $region49
    $region48: #{tpu_custom_call.1} parent=1 // pred_region
      _
    $region49: #{tpu_custom_call.1} parent=1 // pred_fallthru
      _
    %417 = vsyncpa [#allocation3], 1
    %418 = vsyncpa [#allocation5], 1

</llo_original>
